<compile_context>
chip_gen: v6e
topology: v6e:2x2x1
jax: 0.10.0
libtpu: 0.0.40
codegen_flags: <defaults>
</compile_context>

<pallas_src>
import functools

import jax
import jax.numpy as jnp
from jax import lax
from jax.experimental import pallas as pl
from jax.experimental.pallas import tpu as pltpu


def lstm_classifier_kernel(x_ref, p_ref, out_ref, *, T, B, H, I_pad, offs):
    """Whole forward pass in VMEM: LSTM over T steps, then the MLP head.

    x_ref : (T*B, I_pad)  time-major, batch padded to a sublane multiple.
    p_ref : (n_rows, 128) fused parameter slab, 8-aligned row blocks:
            w_ih (I_pad,4H) | w_hh (H,4H) | b (1,4H) | fc1_w (H,128 zero-padded)
            | fc1_b (1,128) | fc2_w (128,128 zero-padded) | fc2_b (1,128)
    out_ref: (B, 128) lane-dense logits (first num_classes lanes are real).
    """
    LANE = 128  # == 4*H for hidden_size 32

    # --- parameters (static, 8-aligned row slices of the fused slab) --------
    w_ih = p_ref[offs["wih"]:offs["wih"] + I_pad, :].astype(jnp.bfloat16)  # (I_pad, 4H)
    w_hh = p_ref[offs["whh"]:offs["whh"] + H, :].astype(jnp.bfloat16)      # (H, 4H)
    b = p_ref[offs["b"]:offs["b"] + 1, :]                                  # (1, 4H)

    # Hoisted input projection: one bf16 MXU call covers every timestep, so the
    # serial h->h dependence chain carries only one small matmul per step.
    gates_x = jnp.dot(x_ref[...].astype(jnp.bfloat16), w_ih,
                      preferred_element_type=jnp.float32) + b              # (T*B, 4H)

    def gate_act(g):
        # sigmoid(x) == 0.5*tanh(0.5*x) + 0.5 : one EUP tanh on the full vreg.
        sg = 0.5 * jnp.tanh(0.5 * g) + 0.5
        th = jnp.tanh(g)
        return (sg[:, 0 * H:1 * H], sg[:, 1 * H:2 * H],
                th[:, 2 * H:3 * H], sg[:, 3 * H:4 * H])   # i, f, g, o

    # t = 0: h = c = 0 -> skip the h @ W_hh matmul and the f*c carry entirely.
    i_g, _, g_g, o_g = gate_act(gates_x[0:B, :])
    c = i_g * g_g
    h = o_g * jnp.tanh(c)

    # Remaining T-1 steps, fully unrolled with static, sublane-aligned slices.
    for t in range(1, T):
        gates = gates_x[t * B:(t + 1) * B, :] + jnp.dot(
            h.astype(jnp.bfloat16), w_hh, preferred_element_type=jnp.float32)
        i_g, f_g, g_g, o_g = gate_act(gates)
        c = f_g * c + i_g * g_g
        h = o_g * jnp.tanh(c)

    # dropout(p=0.2) in eval mode == identity.
    fc1_w = p_ref[offs["f1w"]:offs["f1w"] + H, :]        # (H, 128)  cols >= 32 are 0
    fc1_b = p_ref[offs["f1b"]:offs["f1b"] + 1, :]        # (1, 128)
    fc2_w = p_ref[offs["f2w"]:offs["f2w"] + LANE, :]     # (128, 128) rows >= 32 are 0
    fc2_b = p_ref[offs["f2b"]:offs["f2b"] + 1, :]        # (1, 128)
    hid = jnp.maximum(jnp.dot(h, fc1_w, preferred_element_type=jnp.float32)
                      + fc1_b, 0.0)                      # fc1 + relu, (B, 128)
    out_ref[...] = (jnp.dot(hid, fc2_w, preferred_element_type=jnp.float32)
                    + fc2_b)                             # fc2, lane-dense store


def _round_up(n, m):
    return ((n + m - 1) // m) * m


@jax.jit
def lstm_model_forward(x, params):
    """x: (B, T, input_size) float32 -> logits (B, num_classes)."""
    B, T, I = x.shape
    H = params["w_hh"].shape[1]          # w_hh is (4H, H)
    C = params["fc2_w"].shape[0]
    FC1 = params["fc1_w"].shape[0]       # 32
    LANE = 128
    if 4 * H != LANE:
        raise NotImplementedError("kernel is specialized for hidden_size=32 (4H == 128 lanes)")

    B_pad = max(8, _round_up(B, 8))      # full sublanes / MXU rows
    I_pad = _round_up(I, 8)              # 8-aligned K dim for x @ W_ih

    # Batch/feature zero-pad + time-major flatten: rows [t*B_pad:(t+1)*B_pad] = step t.
    x_p = jnp.zeros((B_pad, T, I_pad), jnp.float32).at[:B, :, :I].set(x)
    x_tm = jnp.transpose(x_p, (1, 0, 2)).reshape(T * B_pad, I_pad)

    # Fused, lane-dense parameter slab (one DMA instead of seven); every block
    # starts at an 8-aligned row.
    o_wih = 0
    o_whh = o_wih + I_pad
    o_b = _round_up(o_whh + H, 8)
    o_f1w = o_b + 8
    o_f1b = _round_up(o_f1w + H, 8)
    o_f2w = o_f1b + 8
    o_f2b = _round_up(o_f2w + LANE, 8)
    n_rows = o_f2b + 8

    slab = jnp.zeros((n_rows, LANE), jnp.float32)
    slab = slab.at[o_wih:o_wih + I, :4 * H].set(params["w_ih"].T)          # (I, 4H)
    slab = slab.at[o_whh:o_whh + H, :4 * H].set(params["w_hh"].T)          # (H, 4H)
    slab = slab.at[o_b, :4 * H].set(params["b_ih"] + params["b_hh"])       # fused bias
    slab = slab.at[o_f1w:o_f1w + H, :FC1].set(params["fc1_w"].T)           # (H, 32)
    slab = slab.at[o_f1b, :FC1].set(params["fc1_b"])
    slab = slab.at[o_f2w:o_f2w + FC1, :C].set(params["fc2_w"].T)           # (32, C)
    slab = slab.at[o_f2b, :C].set(params["fc2_b"])

    offs = dict(wih=o_wih, whh=o_whh, b=o_b, f1w=o_f1w, f1b=o_f1b,
                f2w=o_f2w, f2b=o_f2b)
    vmem = pl.BlockSpec(memory_space=pltpu.MemorySpace.VMEM)
    kernel = functools.partial(lstm_classifier_kernel, T=T, B=B_pad, H=H,
                               I_pad=I_pad, offs=offs)
    out = pl.pallas_call(
        kernel,
        out_shape=jax.ShapeDtypeStruct((B_pad, LANE), jnp.float32),
        in_specs=[vmem, vmem],
        out_specs=vmem,
    )(x_tm, slab)
    return out[:B, :C]


def init_params(key, input_size, hidden_size, num_classes):
    """Deterministic PyTorch-style uniform(-1/sqrt(fan), 1/sqrt(fan)) init."""
    ks = jax.random.split(key, 10)
    k_lstm = 1.0 / jnp.sqrt(hidden_size)
    k_fc1 = 1.0 / jnp.sqrt(hidden_size)
    k_fc2 = 1.0 / jnp.sqrt(32)
    u = lambda k, shape, s: jax.random.uniform(k, shape, jnp.float32, -s, s)
    return {
        "w_ih": u(ks[0], (4 * hidden_size, input_size), k_lstm),
        "w_hh": u(ks[1], (4 * hidden_size, hidden_size), k_lstm),
        "b_ih": u(ks[2], (4 * hidden_size,), k_lstm),
        "b_hh": u(ks[3], (4 * hidden_size,), k_lstm),
        "fc1_w": u(ks[4], (32, hidden_size), k_fc1),
        "fc1_b": u(ks[5], (32,), k_fc1),
        "fc2_w": u(ks[6], (num_classes, 32), k_fc2),
        "fc2_b": u(ks[7], (num_classes,), k_fc2),
    }


def reference_forward(x, params):
    """Pure-JAX f32 reference mirroring PyTorch LSTM semantics (gate order i,f,g,o)."""
    B, T, I = x.shape
    H = params["w_hh"].shape[1]          # w_hh is (4H, H)
    hp = lax.Precision.HIGHEST
    h = jnp.zeros((B, H), jnp.float32)
    c = jnp.zeros((B, H), jnp.float32)
    for t in range(T):
        g = (jnp.dot(x[:, t, :], params["w_ih"].T, precision=hp)
             + jnp.dot(h, params["w_hh"].T, precision=hp)
             + params["b_ih"] + params["b_hh"])
        i_g = jax.nn.sigmoid(g[:, 0 * H:1 * H])
        f_g = jax.nn.sigmoid(g[:, 1 * H:2 * H])
        g_g = jnp.tanh(g[:, 2 * H:3 * H])
        o_g = jax.nn.sigmoid(g[:, 3 * H:4 * H])
        c = f_g * c + i_g * g_g
        h = o_g * jnp.tanh(c)
    hid = jnp.maximum(jnp.dot(h, params["fc1_w"].T, precision=hp)
                      + params["fc1_b"], 0.0)
    return jnp.dot(hid, params["fc2_w"].T, precision=hp) + params["fc2_b"]


if __name__ == "__main__":
    # Pose-keypoint classifier shapes: 17 keypoints * 2 coords = 34 features,
    # seq=8, batch=2, hidden=32, 3 classes.
    B, T, INPUT_SIZE, HIDDEN_SIZE, NUM_CLASSES = 2, 8, 34, 32, 3

    key = jax.random.PRNGKey(0)
    k_x, k_p = jax.random.split(key)
    x = jax.random.normal(k_x, (B, T, INPUT_SIZE), jnp.float32)
    params = init_params(k_p, INPUT_SIZE, HIDDEN_SIZE, NUM_CLASSES)

    out = lstm_model_forward(x, params)
    out = jax.block_until_ready(out)

    ref = reference_forward(x, params)
    assert out.shape == (B, NUM_CLASSES)
    # Kernel uses single-pass bf16 MXU operands (f32 accumulation) on the LSTM
    # matmuls; reference is full f32 HIGHEST precision, hence the 2e-2 tolerance.
    assert jnp.allclose(out, ref, atol=2e-2, rtol=2e-2), "mismatch vs JAX reference"

    print("KERNEL_OK")
</pallas_src>

<mosaic_0001>
module attributes {stable_mosaic.version = 11 : i64} {
  func.func @lstm_classifier_kernel(%arg0: memref<64x40xf32, #tpu.memory_space<vmem>>, %arg1: memref<256x128xf32, #tpu.memory_space<vmem>>, %arg2: memref<8x128xf32, #tpu.memory_space<vmem>>) attributes {dimension_semantics = [], scalar_prefetch = 0 : i64, scratch_operands = 0 : i64, tpu.core_type = #tpu.core_type<tc>} {
    %c0 = arith.constant 0 : index
    %c0_0 = arith.constant 0 : index
    %0 = vector.load %arg1[%c0, %c0_0] : memref<256x128xf32, #tpu.memory_space<vmem>>, vector<40x128xf32>
    %1 = arith.truncf %0 : vector<40x128xf32> to vector<40x128xbf16>
    %c40 = arith.constant 40 : index
    %c0_1 = arith.constant 0 : index
    %2 = vector.load %arg1[%c40, %c0_1] : memref<256x128xf32, #tpu.memory_space<vmem>>, vector<32x128xf32>
    %3 = arith.truncf %2 : vector<32x128xf32> to vector<32x128xbf16>
    %c72 = arith.constant 72 : index
    %c0_2 = arith.constant 0 : index
    %4 = vector.load %arg1[%c72, %c0_2] : memref<256x128xf32, #tpu.memory_space<vmem>>, vector<1x128xf32>
    %c0_3 = arith.constant 0 : index
    %c0_4 = arith.constant 0 : index
    %5 = vector.load %arg0[%c0_3, %c0_4] : memref<64x40xf32, #tpu.memory_space<vmem>>, vector<64x40xf32>
    %6 = arith.truncf %5 : vector<64x40xf32> to vector<64x40xbf16>
    %cst = arith.constant dense<0.000000e+00> : vector<64x128xf32>
    %7 = tpu.matmul %6, %1, %cst {dimension_numbers = #tpu.dot_dimension_numbers<[1], [0], [0], [1], [0, 0, 1, 1], [], []>} : vector<64x40xbf16>, vector<40x128xbf16>, vector<64x128xf32> -> vector<64x128xf32>
    %8 = vector.broadcast %4 : vector<1x128xf32> to vector<64x128xf32>
    %9 = arith.addf %7, %8 : vector<64x128xf32>
    %10 = vector.extract_strided_slice %9 {offsets = [0, 0], sizes = [8, 128], strides = [1, 1]} : vector<64x128xf32> to vector<8x128xf32>
    %cst_5 = arith.constant 5.000000e-01 : f32
    %11 = vector.broadcast %cst_5 : f32 to vector<8x128xf32>
    %12 = arith.mulf %11, %10 : vector<8x128xf32>
    %13 = math.tanh %12 : vector<8x128xf32>
    %cst_6 = arith.constant 5.000000e-01 : f32
    %14 = vector.broadcast %cst_6 : f32 to vector<8x128xf32>
    %15 = arith.mulf %14, %13 : vector<8x128xf32>
    %cst_7 = arith.constant 5.000000e-01 : f32
    %16 = vector.broadcast %cst_7 : f32 to vector<8x128xf32>
    %17 = arith.addf %15, %16 : vector<8x128xf32>
    %18 = math.tanh %10 : vector<8x128xf32>
    %19 = vector.extract_strided_slice %17 {offsets = [0, 0], sizes = [8, 32], strides = [1, 1]} : vector<8x128xf32> to vector<8x32xf32>
    %20 = vector.extract_strided_slice %18 {offsets = [0, 64], sizes = [8, 32], strides = [1, 1]} : vector<8x128xf32> to vector<8x32xf32>
    %21 = vector.extract_strided_slice %17 {offsets = [0, 96], sizes = [8, 32], strides = [1, 1]} : vector<8x128xf32> to vector<8x32xf32>
    %22 = arith.mulf %19, %20 : vector<8x32xf32>
    %23 = math.tanh %22 : vector<8x32xf32>
    %24 = arith.mulf %21, %23 : vector<8x32xf32>
    %25 = vector.extract_strided_slice %9 {offsets = [8, 0], sizes = [8, 128], strides = [1, 1]} : vector<64x128xf32> to vector<8x128xf32>
    %26 = arith.truncf %24 : vector<8x32xf32> to vector<8x32xbf16>
    %cst_8 = arith.constant dense<0.000000e+00> : vector<8x128xf32>
    %27 = tpu.matmul %26, %3, %cst_8 {dimension_numbers = #tpu.dot_dimension_numbers<[1], [0], [0], [1], [0, 0, 1, 1], [], []>} : vector<8x32xbf16>, vector<32x128xbf16>, vector<8x128xf32> -> vector<8x128xf32>
    %28 = arith.addf %25, %27 : vector<8x128xf32>
    %cst_9 = arith.constant 5.000000e-01 : f32
    %29 = vector.broadcast %cst_9 : f32 to vector<8x128xf32>
    %30 = arith.mulf %29, %28 : vector<8x128xf32>
    %31 = math.tanh %30 : vector<8x128xf32>
    %cst_10 = arith.constant 5.000000e-01 : f32
    %32 = vector.broadcast %cst_10 : f32 to vector<8x128xf32>
    %33 = arith.mulf %32, %31 : vector<8x128xf32>
    %cst_11 = arith.constant 5.000000e-01 : f32
    %34 = vector.broadcast %cst_11 : f32 to vector<8x128xf32>
    %35 = arith.addf %33, %34 : vector<8x128xf32>
    %36 = math.tanh %28 : vector<8x128xf32>
    %37 = vector.extract_strided_slice %35 {offsets = [0, 0], sizes = [8, 32], strides = [1, 1]} : vector<8x128xf32> to vector<8x32xf32>
    %38 = vector.extract_strided_slice %35 {offsets = [0, 32], sizes = [8, 32], strides = [1, 1]} : vector<8x128xf32> to vector<8x32xf32>
    %39 = vector.extract_strided_slice %36 {offsets = [0, 64], sizes = [8, 32], strides = [1, 1]} : vector<8x128xf32> to vector<8x32xf32>
    %40 = vector.extract_strided_slice %35 {offsets = [0, 96], sizes = [8, 32], strides = [1, 1]} : vector<8x128xf32> to vector<8x32xf32>
    %41 = arith.mulf %38, %22 : vector<8x32xf32>
    %42 = arith.mulf %37, %39 : vector<8x32xf32>
    %43 = arith.addf %41, %42 : vector<8x32xf32>
    %44 = math.tanh %43 : vector<8x32xf32>
    %45 = arith.mulf %40, %44 : vector<8x32xf32>
    %46 = vector.extract_strided_slice %9 {offsets = [16, 0], sizes = [8, 128], strides = [1, 1]} : vector<64x128xf32> to vector<8x128xf32>
    %47 = arith.truncf %45 : vector<8x32xf32> to vector<8x32xbf16>
    %cst_12 = arith.constant dense<0.000000e+00> : vector<8x128xf32>
    %48 = tpu.matmul %47, %3, %cst_12 {dimension_numbers = #tpu.dot_dimension_numbers<[1], [0], [0], [1], [0, 0, 1, 1], [], []>} : vector<8x32xbf16>, vector<32x128xbf16>, vector<8x128xf32> -> vector<8x128xf32>
    %49 = arith.addf %46, %48 : vector<8x128xf32>
    %cst_13 = arith.constant 5.000000e-01 : f32
    %50 = vector.broadcast %cst_13 : f32 to vector<8x128xf32>
    %51 = arith.mulf %50, %49 : vector<8x128xf32>
    %52 = math.tanh %51 : vector<8x128xf32>
    %cst_14 = arith.constant 5.000000e-01 : f32
    %53 = vector.broadcast %cst_14 : f32 to vector<8x128xf32>
    %54 = arith.mulf %53, %52 : vector<8x128xf32>
    %cst_15 = arith.constant 5.000000e-01 : f32
    %55 = vector.broadcast %cst_15 : f32 to vector<8x128xf32>
    %56 = arith.addf %54, %55 : vector<8x128xf32>
    %57 = math.tanh %49 : vector<8x128xf32>
    %58 = vector.extract_strided_slice %56 {offsets = [0, 0], sizes = [8, 32], strides = [1, 1]} : vector<8x128xf32> to vector<8x32xf32>
    %59 = vector.extract_strided_slice %56 {offsets = [0, 32], sizes = [8, 32], strides = [1, 1]} : vector<8x128xf32> to vector<8x32xf32>
    %60 = vector.extract_strided_slice %57 {offsets = [0, 64], sizes = [8, 32], strides = [1, 1]} : vector<8x128xf32> to vector<8x32xf32>
    %61 = vector.extract_strided_slice %56 {offsets = [0, 96], sizes = [8, 32], strides = [1, 1]} : vector<8x128xf32> to vector<8x32xf32>
    %62 = arith.mulf %59, %43 : vector<8x32xf32>
    %63 = arith.mulf %58, %60 : vector<8x32xf32>
    %64 = arith.addf %62, %63 : vector<8x32xf32>
    %65 = math.tanh %64 : vector<8x32xf32>
    %66 = arith.mulf %61, %65 : vector<8x32xf32>
    %67 = vector.extract_strided_slice %9 {offsets = [24, 0], sizes = [8, 128], strides = [1, 1]} : vector<64x128xf32> to vector<8x128xf32>
    %68 = arith.truncf %66 : vector<8x32xf32> to vector<8x32xbf16>
    %cst_16 = arith.constant dense<0.000000e+00> : vector<8x128xf32>
    %69 = tpu.matmul %68, %3, %cst_16 {dimension_numbers = #tpu.dot_dimension_numbers<[1], [0], [0], [1], [0, 0, 1, 1], [], []>} : vector<8x32xbf16>, vector<32x128xbf16>, vector<8x128xf32> -> vector<8x128xf32>
    %70 = arith.addf %67, %69 : vector<8x128xf32>
    %cst_17 = arith.constant 5.000000e-01 : f32
    %71 = vector.broadcast %cst_17 : f32 to vector<8x128xf32>
    %72 = arith.mulf %71, %70 : vector<8x128xf32>
    %73 = math.tanh %72 : vector<8x128xf32>
    %cst_18 = arith.constant 5.000000e-01 : f32
    %74 = vector.broadcast %cst_18 : f32 to vector<8x128xf32>
    %75 = arith.mulf %74, %73 : vector<8x128xf32>
    %cst_19 = arith.constant 5.000000e-01 : f32
    %76 = vector.broadcast %cst_19 : f32 to vector<8x128xf32>
    %77 = arith.addf %75, %76 : vector<8x128xf32>
    %78 = math.tanh %70 : vector<8x128xf32>
    %79 = vector.extract_strided_slice %77 {offsets = [0, 0], sizes = [8, 32], strides = [1, 1]} : vector<8x128xf32> to vector<8x32xf32>
    %80 = vector.extract_strided_slice %77 {offsets = [0, 32], sizes = [8, 32], strides = [1, 1]} : vector<8x128xf32> to vector<8x32xf32>
    %81 = vector.extract_strided_slice %78 {offsets = [0, 64], sizes = [8, 32], strides = [1, 1]} : vector<8x128xf32> to vector<8x32xf32>
    %82 = vector.extract_strided_slice %77 {offsets = [0, 96], sizes = [8, 32], strides = [1, 1]} : vector<8x128xf32> to vector<8x32xf32>
    %83 = arith.mulf %80, %64 : vector<8x32xf32>
    %84 = arith.mulf %79, %81 : vector<8x32xf32>
    %85 = arith.addf %83, %84 : vector<8x32xf32>
    %86 = math.tanh %85 : vector<8x32xf32>
    %87 = arith.mulf %82, %86 : vector<8x32xf32>
    %88 = vector.extract_strided_slice %9 {offsets = [32, 0], sizes = [8, 128], strides = [1, 1]} : vector<64x128xf32> to vector<8x128xf32>
    %89 = arith.truncf %87 : vector<8x32xf32> to vector<8x32xbf16>
    %cst_20 = arith.constant dense<0.000000e+00> : vector<8x128xf32>
    %90 = tpu.matmul %89, %3, %cst_20 {dimension_numbers = #tpu.dot_dimension_numbers<[1], [0], [0], [1], [0, 0, 1, 1], [], []>} : vector<8x32xbf16>, vector<32x128xbf16>, vector<8x128xf32> -> vector<8x128xf32>
    %91 = arith.addf %88, %90 : vector<8x128xf32>
    %cst_21 = arith.constant 5.000000e-01 : f32
    %92 = vector.broadcast %cst_21 : f32 to vector<8x128xf32>
    %93 = arith.mulf %92, %91 : vector<8x128xf32>
    %94 = math.tanh %93 : vector<8x128xf32>
    %cst_22 = arith.constant 5.000000e-01 : f32
    %95 = vector.broadcast %cst_22 : f32 to vector<8x128xf32>
    %96 = arith.mulf %95, %94 : vector<8x128xf32>
    %cst_23 = arith.constant 5.000000e-01 : f32
    %97 = vector.broadcast %cst_23 : f32 to vector<8x128xf32>
    %98 = arith.addf %96, %97 : vector<8x128xf32>
    %99 = math.tanh %91 : vector<8x128xf32>
    %100 = vector.extract_strided_slice %98 {offsets = [0, 0], sizes = [8, 32], strides = [1, 1]} : vector<8x128xf32> to vector<8x32xf32>
    %101 = vector.extract_strided_slice %98 {offsets = [0, 32], sizes = [8, 32], strides = [1, 1]} : vector<8x128xf32> to vector<8x32xf32>
    %102 = vector.extract_strided_slice %99 {offsets = [0, 64], sizes = [8, 32], strides = [1, 1]} : vector<8x128xf32> to vector<8x32xf32>
    %103 = vector.extract_strided_slice %98 {offsets = [0, 96], sizes = [8, 32], strides = [1, 1]} : vector<8x128xf32> to vector<8x32xf32>
    %104 = arith.mulf %101, %85 : vector<8x32xf32>
    %105 = arith.mulf %100, %102 : vector<8x32xf32>
    %106 = arith.addf %104, %105 : vector<8x32xf32>
    %107 = math.tanh %106 : vector<8x32xf32>
    %108 = arith.mulf %103, %107 : vector<8x32xf32>
    %109 = vector.extract_strided_slice %9 {offsets = [40, 0], sizes = [8, 128], strides = [1, 1]} : vector<64x128xf32> to vector<8x128xf32>
    %110 = arith.truncf %108 : vector<8x32xf32> to vector<8x32xbf16>
    %cst_24 = arith.constant dense<0.000000e+00> : vector<8x128xf32>
    %111 = tpu.matmul %110, %3, %cst_24 {dimension_numbers = #tpu.dot_dimension_numbers<[1], [0], [0], [1], [0, 0, 1, 1], [], []>} : vector<8x32xbf16>, vector<32x128xbf16>, vector<8x128xf32> -> vector<8x128xf32>
    %112 = arith.addf %109, %111 : vector<8x128xf32>
    %cst_25 = arith.constant 5.000000e-01 : f32
    %113 = vector.broadcast %cst_25 : f32 to vector<8x128xf32>
    %114 = arith.mulf %113, %112 : vector<8x128xf32>
    %115 = math.tanh %114 : vector<8x128xf32>
    %cst_26 = arith.constant 5.000000e-01 : f32
    %116 = vector.broadcast %cst_26 : f32 to vector<8x128xf32>
    %117 = arith.mulf %116, %115 : vector<8x128xf32>
    %cst_27 = arith.constant 5.000000e-01 : f32
    %118 = vector.broadcast %cst_27 : f32 to vector<8x128xf32>
    %119 = arith.addf %117, %118 : vector<8x128xf32>
    %120 = math.tanh %112 : vector<8x128xf32>
    %121 = vector.extract_strided_slice %119 {offsets = [0, 0], sizes = [8, 32], strides = [1, 1]} : vector<8x128xf32> to vector<8x32xf32>
    %122 = vector.extract_strided_slice %119 {offsets = [0, 32], sizes = [8, 32], strides = [1, 1]} : vector<8x128xf32> to vector<8x32xf32>
    %123 = vector.extract_strided_slice %120 {offsets = [0, 64], sizes = [8, 32], strides = [1, 1]} : vector<8x128xf32> to vector<8x32xf32>
    %124 = vector.extract_strided_slice %119 {offsets = [0, 96], sizes = [8, 32], strides = [1, 1]} : vector<8x128xf32> to vector<8x32xf32>
    %125 = arith.mulf %122, %106 : vector<8x32xf32>
    %126 = arith.mulf %121, %123 : vector<8x32xf32>
    %127 = arith.addf %125, %126 : vector<8x32xf32>
    %128 = math.tanh %127 : vector<8x32xf32>
    %129 = arith.mulf %124, %128 : vector<8x32xf32>
    %130 = vector.extract_strided_slice %9 {offsets = [48, 0], sizes = [8, 128], strides = [1, 1]} : vector<64x128xf32> to vector<8x128xf32>
    %131 = arith.truncf %129 : vector<8x32xf32> to vector<8x32xbf16>
    %cst_28 = arith.constant dense<0.000000e+00> : vector<8x128xf32>
    %132 = tpu.matmul %131, %3, %cst_28 {dimension_numbers = #tpu.dot_dimension_numbers<[1], [0], [0], [1], [0, 0, 1, 1], [], []>} : vector<8x32xbf16>, vector<32x128xbf16>, vector<8x128xf32> -> vector<8x128xf32>
    %133 = arith.addf %130, %132 : vector<8x128xf32>
    %cst_29 = arith.constant 5.000000e-01 : f32
    %134 = vector.broadcast %cst_29 : f32 to vector<8x128xf32>
    %135 = arith.mulf %134, %133 : vector<8x128xf32>
    %136 = math.tanh %135 : vector<8x128xf32>
    %cst_30 = arith.constant 5.000000e-01 : f32
    %137 = vector.broadcast %cst_30 : f32 to vector<8x128xf32>
    %138 = arith.mulf %137, %136 : vector<8x128xf32>
    %cst_31 = arith.constant 5.000000e-01 : f32
    %139 = vector.broadcast %cst_31 : f32 to vector<8x128xf32>
    %140 = arith.addf %138, %139 : vector<8x128xf32>
    %141 = math.tanh %133 : vector<8x128xf32>
    %142 = vector.extract_strided_slice %140 {offsets = [0, 0], sizes = [8, 32], strides = [1, 1]} : vector<8x128xf32> to vector<8x32xf32>
    %143 = vector.extract_strided_slice %140 {offsets = [0, 32], sizes = [8, 32], strides = [1, 1]} : vector<8x128xf32> to vector<8x32xf32>
    %144 = vector.extract_strided_slice %141 {offsets = [0, 64], sizes = [8, 32], strides = [1, 1]} : vector<8x128xf32> to vector<8x32xf32>
    %145 = vector.extract_strided_slice %140 {offsets = [0, 96], sizes = [8, 32], strides = [1, 1]} : vector<8x128xf32> to vector<8x32xf32>
    %146 = arith.mulf %143, %127 : vector<8x32xf32>
    %147 = arith.mulf %142, %144 : vector<8x32xf32>
    %148 = arith.addf %146, %147 : vector<8x32xf32>
    %149 = math.tanh %148 : vector<8x32xf32>
    %150 = arith.mulf %145, %149 : vector<8x32xf32>
    %151 = vector.extract_strided_slice %9 {offsets = [56, 0], sizes = [8, 128], strides = [1, 1]} : vector<64x128xf32> to vector<8x128xf32>
    %152 = arith.truncf %150 : vector<8x32xf32> to vector<8x32xbf16>
    %cst_32 = arith.constant dense<0.000000e+00> : vector<8x128xf32>
    %153 = tpu.matmul %152, %3, %cst_32 {dimension_numbers = #tpu.dot_dimension_numbers<[1], [0], [0], [1], [0, 0, 1, 1], [], []>} : vector<8x32xbf16>, vector<32x128xbf16>, vector<8x128xf32> -> vector<8x128xf32>
    %154 = arith.addf %151, %153 : vector<8x128xf32>
    %cst_33 = arith.constant 5.000000e-01 : f32
    %155 = vector.broadcast %cst_33 : f32 to vector<8x128xf32>
    %156 = arith.mulf %155, %154 : vector<8x128xf32>
    %157 = math.tanh %156 : vector<8x128xf32>
    %cst_34 = arith.constant 5.000000e-01 : f32
    %158 = vector.broadcast %cst_34 : f32 to vector<8x128xf32>
    %159 = arith.mulf %158, %157 : vector<8x128xf32>
    %cst_35 = arith.constant 5.000000e-01 : f32
    %160 = vector.broadcast %cst_35 : f32 to vector<8x128xf32>
    %161 = arith.addf %159, %160 : vector<8x128xf32>
    %162 = math.tanh %154 : vector<8x128xf32>
    %163 = vector.extract_strided_slice %161 {offsets = [0, 0], sizes = [8, 32], strides = [1, 1]} : vector<8x128xf32> to vector<8x32xf32>
    %164 = vector.extract_strided_slice %161 {offsets = [0, 32], sizes = [8, 32], strides = [1, 1]} : vector<8x128xf32> to vector<8x32xf32>
    %165 = vector.extract_strided_slice %162 {offsets = [0, 64], sizes = [8, 32], strides = [1, 1]} : vector<8x128xf32> to vector<8x32xf32>
    %166 = vector.extract_strided_slice %161 {offsets = [0, 96], sizes = [8, 32], strides = [1, 1]} : vector<8x128xf32> to vector<8x32xf32>
    %167 = arith.mulf %164, %148 : vector<8x32xf32>
    %168 = arith.mulf %163, %165 : vector<8x32xf32>
    %169 = arith.addf %167, %168 : vector<8x32xf32>
    %170 = math.tanh %169 : vector<8x32xf32>
    %171 = arith.mulf %166, %170 : vector<8x32xf32>
    %c80 = arith.constant 80 : index
    %c0_36 = arith.constant 0 : index
    %172 = vector.load %arg1[%c80, %c0_36] : memref<256x128xf32, #tpu.memory_space<vmem>>, vector<32x128xf32>
    %c112 = arith.constant 112 : index
    %c0_37 = arith.constant 0 : index
    %173 = vector.load %arg1[%c112, %c0_37] : memref<256x128xf32, #tpu.memory_space<vmem>>, vector<1x128xf32>
    %c120 = arith.constant 120 : index
    %c0_38 = arith.constant 0 : index
    %174 = vector.load %arg1[%c120, %c0_38] : memref<256x128xf32, #tpu.memory_space<vmem>>, vector<128x128xf32>
    %c248 = arith.constant 248 : index
    %c0_39 = arith.constant 0 : index
    %175 = vector.load %arg1[%c248, %c0_39] : memref<256x128xf32, #tpu.memory_space<vmem>>, vector<1x128xf32>
    %cst_40 = arith.constant dense<0.000000e+00> : vector<8x128xf32>
    %176 = tpu.matmul %171, %172, %cst_40 {dimension_numbers = #tpu.dot_dimension_numbers<[1], [0], [0], [1], [0, 0, 1, 1], [], []>} : vector<8x32xf32>, vector<32x128xf32>, vector<8x128xf32> -> vector<8x128xf32>
    %177 = vector.broadcast %173 : vector<1x128xf32> to vector<8x128xf32>
    %178 = arith.addf %176, %177 : vector<8x128xf32>
    %cst_41 = arith.constant 0.000000e+00 : f32
    %179 = vector.broadcast %cst_41 : f32 to vector<8x128xf32>
    %180 = arith.maximumf %178, %179 : vector<8x128xf32>
    %cst_42 = arith.constant dense<0.000000e+00> : vector<8x128xf32>
    %181 = tpu.matmul %180, %174, %cst_42 {dimension_numbers = #tpu.dot_dimension_numbers<[1], [0], [0], [1], [0, 0, 1, 1], [], []>} : vector<8x128xf32>, vector<128x128xf32>, vector<8x128xf32> -> vector<8x128xf32>
    %182 = vector.broadcast %175 : vector<1x128xf32> to vector<8x128xf32>
    %183 = arith.addf %181, %182 : vector<8x128xf32>
    %c0_43 = arith.constant 0 : index
    %c0_44 = arith.constant 0 : index
    %184 = vector.load %arg2[%c0_43, %c0_44] : memref<8x128xf32, #tpu.memory_space<vmem>>, vector<8x128xf32>
    tpu.vector_store %arg2[%c0_43, %c0_44], %183 {strides = array<i32>} : memref<8x128xf32, #tpu.memory_space<vmem>>, vector<8x128xf32>,
    return
  }
}

</mosaic_0001>

<llo_original>
// kernel: lstm_model_forward.1
$region0: #{lstm_model_forward.1}
  #allocation0 [shape = 'u32[]', space=smem, size = 0x4, offset = 0x4, fixed_abs, tag = 'smem constant byte address 0x4 - core index']
  #allocation1 [shape = 'u32[144,128]{1,0:T(1,128)}', space=vmem, size = 0x12000, scoped, tag = 'internal scratch']
  %s0 = inlined_call_operand.vmem [shape: f32[64,40], index: 0, kind: input, shape index: {}]
  %s1 = inlined_call_operand.vmem [shape: f32[256,128], index: 1, kind: input, shape index: {}]
  %s2 = inlined_call_operand.vmem [shape: f32[8,128], index: 2, kind: output, shape index: {}]
  %s3 = sld [smem:[#allocation0]]
  $region18: #{lstm_model_forward.1} parent=0
    _
  %s5 = ssub.s32 1, %s3
  %s6 = scalar_select 0, %s5, %s3
  // Predicated region
  $region2: #{lstm_model_forward.1} parent=0 // pred_check
    _
  $region3: #{lstm_model_forward.1} parent=0 // pred_check_branch
    %8 = sbr.rel (0) target = $region5
  $region4: #{lstm_model_forward.1} parent=0 // pred_region
    _
  $region5: #{lstm_model_forward.1} parent=0 // pred_fallthru
    _
  // Predicated region
  $region6: #{lstm_model_forward.1} parent=0 // pred_check
    _
  $region7: #{lstm_model_forward.1} parent=0 // pred_check_branch
    %10 = sbr.rel (0) target = $region9
  $region8: #{lstm_model_forward.1} parent=0 // pred_region
    _
  $region9: #{lstm_model_forward.1} parent=0 // pred_fallthru
    _
  %v12 = vld [vmem:[%s1] sm:$0xff]
  %v13 = vld [vmem:[%s1 + $0x8] sm:$0xff]
  %v14 = vld [vmem:[%s1 + $0x10] sm:$0xff]
  %v15 = vld [vmem:[%s1 + $0x18] sm:$0xff]
  %v16 = vld [vmem:[%s1 + $0x20] sm:$0xff]
  %v17 = vpack.c.bf16 %v13, %v12
  %v18 = vpack.c.bf16 %v15, %v14
  %v19 = vpack.c.bf16 %v16, %v16
  %v20 = vld [vmem:[%s1 + $0x28] sm:$0xff]
  %v21 = vld [vmem:[%s1 + $0x30] sm:$0xff]
  %v22 = vld [vmem:[%s1 + $0x38] sm:$0xff]
  %v23 = vld [vmem:[%s1 + $0x40] sm:$0xff]
  %v24 = vpack.c.bf16 %v21, %v20
  %v25 = vpack.c.bf16 %v23, %v22
  %v26 = vld [vmem:[%s1 + $0x48] sm:$0x1]
  %v27 = vld [vmem:[%s0] sm:$0xff]
  %v28 = vld [vmem:[%s0 + $0x8] sm:$0xff]
  %v29 = vld [vmem:[%s0 + $0x10] sm:$0xff]
  %v30 = vld [vmem:[%s0 + $0x18] sm:$0xff]
  %v31 = vld [vmem:[%s0 + $0x20] sm:$0xff]
  %v32 = vld [vmem:[%s0 + $0x28] sm:$0xff]
  %v33 = vld [vmem:[%s0 + $0x30] sm:$0xff]
  %v34 = vld [vmem:[%s0 + $0x38] sm:$0xff]
  %v35 = vpack.c.bf16 %v28, %v27
  %v36 = vpack.c.bf16 %v30, %v29
  %v37 = vpack.c.bf16 %v32, %v31
  %v38 = vpack.c.bf16 %v34, %v33
  %v39 = vlaneseq
  %v40 = vshrl.u32 %v39, 7
  %v41 = vsub.s32 0, %v40
  %v42 = vrot.slane %v26, %v41
  %vm43 = vcmask 326656
  %v45 = vsel %vm43, %v35, 0
  %v48 = vsel %vm43, %v36, 0
  %v51 = vsel %vm43, %v37, 0
  %v54 = vsel %vm43, %v38, 0
  %vm56 = vcmask 1043456
  %v58 = vsel %vm56, %v19, 0
  %60 = vmatprep.subr.bf16.mxu0 0
  %61 = vmatpush1.bf16.msra.mxu0 0
  %62 = vmatprep.subr.bf16.mxu0 0
  %63 = vmatpush1.bf16.msra.mxu0 0
  %64 = vmatprep.subr.bf16.mxu0 0
  %65 = vmatpush1.bf16.msra.mxu0 0
  %66 = vmatprep.subr.bf16.mxu0 0
  %67 = vmatpush1.bf16.msra.mxu0 0
  %68 = vmatprep.subr.bf16.mxu0 0
  %69 = vmatpush1.bf16.msra.mxu0 0
  %70 = vmatprep.subr.bf16.mxu0 0
  %71 = vmatpush1.bf16.msra.mxu0 %v58
  %72 = vmatprep.subr.bf16.mxu0 0
  %73 = vmatpush1.bf16.msra.mxu0 %v18
  %74 = vmatprep.subr.bf16.mxu0 0
  %75 = vmatpush1.bf16.msra.mxu0 %v17
  %76 = vmatprep.subr.bf16.mxu0 0
  %77 = vmatpush2.bf16.msra.mxu0 0
  %78 = vmatprep.subr.bf16.mxu0 0
  %79 = vmatpush2.bf16.msra.mxu0 0
  %80 = vmatprep.subr.bf16.mxu0 0
  %81 = vmatpush2.bf16.msra.mxu0 0
  %82 = vmatprep.subr.bf16.mxu0 0
  %83 = vmatpush2.bf16.msra.mxu0 0
  %84 = vmatprep.subr.bf16.mxu0 0
  %85 = vmatpush2.bf16.msra.mxu0 0
  %86 = vmatprep.subr.bf16.mxu0 0
  %87 = vmatpush2.bf16.msra.mxu0 0
  %88 = vmatprep.subr.bf16.mxu0 0
  %89 = vmatpush2.bf16.msra.mxu0 0
  %90 = vmatprep.subr.bf16.mxu0 0
  %91 = vmatpush2.bf16.msra.mxu0 0
  %92 = vmatprep.mubr.bf16.mxu0 0
  %93 = vmatmul.mubr.bf16.gmra.mxu0 %v45
  %v94 = vpop.f32.mrf.mxu0
  %v95 = vadd.f32 %v42, %v94
  %v96 = vpop.f32.mrf.mxu0
  %v97 = vpop.f32.mrf.mxu0
  %v98 = vadd.f32 %v42, %v97
  %v99 = vpop.f32.mrf.mxu0
  %100 = vmatprep.mubr.bf16.mxu0 0
  %101 = vmatmul.mubr.bf16.gmra.mxu0 %v48
  %v102 = vpop.f32.mrf.mxu0
  %v103 = vadd.f32 %v42, %v102
  %v104 = vpop.f32.mrf.mxu0
  %v105 = vpop.f32.mrf.mxu0
  %v106 = vadd.f32 %v42, %v105
  %v107 = vpop.f32.mrf.mxu0
  %108 = vmatprep.mubr.bf16.mxu0 0
  %109 = vmatmul.mubr.bf16.gmra.mxu0 %v51
  %v110 = vpop.f32.mrf.mxu0
  %v111 = vadd.f32 %v42, %v110
  %v112 = vpop.f32.mrf.mxu0
  %v113 = vpop.f32.mrf.mxu0
  %v114 = vadd.f32 %v42, %v113
  %v115 = vpop.f32.mrf.mxu0
  %116 = vmatprep.mubr.bf16.mxu0 0
  %117 = vmatmul.mubr.bf16.gmra.mxu0 %v54
  %v118 = vpop.f32.mrf.mxu0
  %v119 = vadd.f32 %v42, %v118
  %v120 = vpop.f32.mrf.mxu0
  %v121 = vpop.f32.mrf.mxu0
  %v122 = vadd.f32 %v42, %v121
  %v123 = vpop.f32.mrf.mxu0
  %124 = vdwg.mxu0
  %v125 = vmul.f32 %v95, 0.5
  %v126 = vtanh.pop %v125
  %v127 = vmul.f32 %v126, 0.5
  %v128 = vadd.f32 %v127, 0.5
  %v129 = vtanh.pop %v95
  %131 = vrot.lane.b32.xlu0 %v129, 64
  %v132 = vpop.permute.xlu0 %131
  %v134 = vmul.f32 %v128, %v132
  %v135 = vtanh.pop %v134
  %137 = vrot.lane.b32.xlu0 %v135, 96
  %v138 = vpop.permute.xlu0 %137
  %v140 = vmul.f32 %v128, %v138
  %v141 = vpack.c.bf16 %v140, %v140
  %143 = vrot.lane.b32.xlu0 %v141, 32
  %v144 = vpop.permute.xlu0 %143
  %vm145 = vcmask 261120
  %v147 = vsel %vm145, %v144, 0
  %149 = vmatprep.subr.bf16.mxu0 0
  %150 = vmatpush1.bf16.msra.mxu0 0
  %151 = vmatprep.subr.bf16.mxu0 0
  %152 = vmatpush1.bf16.msra.mxu0 0
  %153 = vmatprep.subr.bf16.mxu0 0
  %154 = vmatpush1.bf16.msra.mxu0 0
  %155 = vmatprep.subr.bf16.mxu0 0
  %156 = vmatpush1.bf16.msra.mxu0 0
  %157 = vmatprep.subr.bf16.mxu0 0
  %158 = vmatpush1.bf16.msra.mxu0 0
  %159 = vmatprep.subr.bf16.mxu0 0
  %160 = vmatpush1.bf16.msra.mxu0 0
  %161 = vmatprep.subr.bf16.mxu0 0
  %162 = vmatpush1.bf16.msra.mxu0 %v25
  %163 = vmatprep.subr.bf16.mxu0 0
  %164 = vmatpush1.bf16.msra.mxu0 %v24
  %165 = vmatprep.subr.bf16.mxu0 0
  %166 = vmatpush2.bf16.msra.mxu0 0
  %167 = vmatprep.subr.bf16.mxu0 0
  %168 = vmatpush2.bf16.msra.mxu0 0
  %169 = vmatprep.subr.bf16.mxu0 0
  %170 = vmatpush2.bf16.msra.mxu0 0
  %171 = vmatprep.subr.bf16.mxu0 0
  %172 = vmatpush2.bf16.msra.mxu0 0
  %173 = vmatprep.subr.bf16.mxu0 0
  %174 = vmatpush2.bf16.msra.mxu0 0
  %175 = vmatprep.subr.bf16.mxu0 0
  %176 = vmatpush2.bf16.msra.mxu0 0
  %177 = vmatprep.subr.bf16.mxu0 0
  %178 = vmatpush2.bf16.msra.mxu0 0
  %179 = vmatprep.subr.bf16.mxu0 0
  %180 = vmatpush2.bf16.msra.mxu0 0
  %181 = vmatprep.mubr.bf16.mxu0 0
  %182 = vmatmul.mubr.bf16.gmra.mxu0 %v147
  %v183 = vpop.f32.mrf.mxu0
  %v184 = vadd.f32 0.0, %v183
  %v185 = vpop.f32.mrf.mxu0
  %v186 = vpop.f32.mrf.mxu0
  %v187 = vpop.f32.mrf.mxu0
  %188 = vdwg.mxu0
  %v189 = vadd.f32 %v98, %v184
  %v190 = vmul.f32 %v189, 0.5
  %v191 = vtanh.pop %v190
  %v192 = vmul.f32 %v191, 0.5
  %v193 = vadd.f32 %v192, 0.5
  %v194 = vtanh.pop %v189
  %196 = vrot.lane.b32.xlu0 %v134, 32
  %v197 = vpop.permute.xlu0 %196
  %v199 = vmul.f32 %v193, %v197
  %201 = vrot.lane.b32.xlu0 %v194, 64
  %v202 = vpop.permute.xlu0 %201
  %v204 = vmul.f32 %v193, %v202
  %206 = vrot.lane.b32.xlu0 %v204, 32
  %v207 = vpop.permute.xlu0 %206
  %v209 = vadd.f32 %v199, %v207
  %v210 = vtanh.pop %v209
  %212 = vrot.lane.b32.xlu0 %v210, 64
  %v213 = vpop.permute.xlu0 %212
  %v215 = vmul.f32 %v193, %v213
  %v216 = vpack.c.bf16 %v215, %v215
  %218 = vrot.lane.b32.xlu0 %v216, 32
  %v219 = vpop.permute.xlu0 %218
  %v221 = vsel %vm145, %v219, 0
  %223 = vmatprep.subr.bf16.mxu0 0
  %224 = vmatpush1.bf16.msra.mxu0 0
  %225 = vmatprep.subr.bf16.mxu0 0
  %226 = vmatpush1.bf16.msra.mxu0 0
  %227 = vmatprep.subr.bf16.mxu0 0
  %228 = vmatpush1.bf16.msra.mxu0 0
  %229 = vmatprep.subr.bf16.mxu0 0
  %230 = vmatpush1.bf16.msra.mxu0 0
  %231 = vmatprep.subr.bf16.mxu0 0
  %232 = vmatpush1.bf16.msra.mxu0 0
  %233 = vmatprep.subr.bf16.mxu0 0
  %234 = vmatpush1.bf16.msra.mxu0 0
  %235 = vmatprep.subr.bf16.mxu0 0
  %236 = vmatpush1.bf16.msra.mxu0 %v25
  %237 = vmatprep.subr.bf16.mxu0 0
  %238 = vmatpush1.bf16.msra.mxu0 %v24
  %239 = vmatprep.subr.bf16.mxu0 0
  %240 = vmatpush2.bf16.msra.mxu0 0
  %241 = vmatprep.subr.bf16.mxu0 0
  %242 = vmatpush2.bf16.msra.mxu0 0
  %243 = vmatprep.subr.bf16.mxu0 0
  %244 = vmatpush2.bf16.msra.mxu0 0
  %245 = vmatprep.subr.bf16.mxu0 0
  %246 = vmatpush2.bf16.msra.mxu0 0
  %247 = vmatprep.subr.bf16.mxu0 0
  %248 = vmatpush2.bf16.msra.mxu0 0
  %249 = vmatprep.subr.bf16.mxu0 0
  %250 = vmatpush2.bf16.msra.mxu0 0
  %251 = vmatprep.subr.bf16.mxu0 0
  %252 = vmatpush2.bf16.msra.mxu0 0
  %253 = vmatprep.subr.bf16.mxu0 0
  %254 = vmatpush2.bf16.msra.mxu0 0
  %255 = vmatprep.mubr.bf16.mxu0 0
  %256 = vmatmul.mubr.bf16.gmra.mxu0 %v221
  %v257 = vpop.f32.mrf.mxu0
  %v258 = vadd.f32 0.0, %v257
  %v259 = vpop.f32.mrf.mxu0
  %v260 = vpop.f32.mrf.mxu0
  %v261 = vpop.f32.mrf.mxu0
  %262 = vdwg.mxu0
  %v263 = vadd.f32 %v103, %v258
  %v264 = vmul.f32 %v263, 0.5
  %v265 = vtanh.pop %v264
  %v266 = vmul.f32 %v265, 0.5
  %v267 = vadd.f32 %v266, 0.5
  %v268 = vtanh.pop %v263
  %v269 = vmul.f32 %v267, %v209
  %271 = vrot.lane.b32.xlu0 %v268, 64
  %v272 = vpop.permute.xlu0 %271
  %v274 = vmul.f32 %v267, %v272
  %276 = vrot.lane.b32.xlu0 %v274, 32
  %v277 = vpop.permute.xlu0 %276
  %v279 = vadd.f32 %v269, %v277
  %v280 = vtanh.pop %v279
  %282 = vrot.lane.b32.xlu0 %v280, 64
  %v283 = vpop.permute.xlu0 %282
  %v285 = vmul.f32 %v267, %v283
  %v286 = vpack.c.bf16 %v285, %v285
  %288 = vrot.lane.b32.xlu0 %v286, 32
  %v289 = vpop.permute.xlu0 %288
  %v291 = vsel %vm145, %v289, 0
  %293 = vmatprep.subr.bf16.mxu0 0
  %294 = vmatpush1.bf16.msra.mxu0 0
  %295 = vmatprep.subr.bf16.mxu0 0
  %296 = vmatpush1.bf16.msra.mxu0 0
  %297 = vmatprep.subr.bf16.mxu0 0
  %298 = vmatpush1.bf16.msra.mxu0 0
  %299 = vmatprep.subr.bf16.mxu0 0
  %300 = vmatpush1.bf16.msra.mxu0 0
  %301 = vmatprep.subr.bf16.mxu0 0
  %302 = vmatpush1.bf16.msra.mxu0 0
  %303 = vmatprep.subr.bf16.mxu0 0
  %304 = vmatpush1.bf16.msra.mxu0 0
  %305 = vmatprep.subr.bf16.mxu0 0
  %306 = vmatpush1.bf16.msra.mxu0 %v25
  %307 = vmatprep.subr.bf16.mxu0 0
  %308 = vmatpush1.bf16.msra.mxu0 %v24
  %309 = vmatprep.subr.bf16.mxu0 0
  %310 = vmatpush2.bf16.msra.mxu0 0
  %311 = vmatprep.subr.bf16.mxu0 0
  %312 = vmatpush2.bf16.msra.mxu0 0
  %313 = vmatprep.subr.bf16.mxu0 0
  %314 = vmatpush2.bf16.msra.mxu0 0
  %315 = vmatprep.subr.bf16.mxu0 0
  %316 = vmatpush2.bf16.msra.mxu0 0
  %317 = vmatprep.subr.bf16.mxu0 0
  %318 = vmatpush2.bf16.msra.mxu0 0
  %319 = vmatprep.subr.bf16.mxu0 0
  %320 = vmatpush2.bf16.msra.mxu0 0
  %321 = vmatprep.subr.bf16.mxu0 0
  %322 = vmatpush2.bf16.msra.mxu0 0
  %323 = vmatprep.subr.bf16.mxu0 0
  %324 = vmatpush2.bf16.msra.mxu0 0
  %325 = vmatprep.mubr.bf16.mxu0 0
  %326 = vmatmul.mubr.bf16.gmra.mxu0 %v291
  %v327 = vpop.f32.mrf.mxu0
  %v328 = vadd.f32 0.0, %v327
  %v329 = vpop.f32.mrf.mxu0
  %v330 = vpop.f32.mrf.mxu0
  %v331 = vpop.f32.mrf.mxu0
  %332 = vdwg.mxu0
  %v333 = vadd.f32 %v106, %v328
  %v334 = vmul.f32 %v333, 0.5
  %v335 = vtanh.pop %v334
  %v336 = vmul.f32 %v335, 0.5
  %v337 = vadd.f32 %v336, 0.5
  %v338 = vtanh.pop %v333
  %v339 = vmul.f32 %v337, %v279
  %341 = vrot.lane.b32.xlu0 %v338, 64
  %v342 = vpop.permute.xlu0 %341
  %v344 = vmul.f32 %v337, %v342
  %346 = vrot.lane.b32.xlu0 %v344, 32
  %v347 = vpop.permute.xlu0 %346
  %v349 = vadd.f32 %v339, %v347
  %v350 = vtanh.pop %v349
  %352 = vrot.lane.b32.xlu0 %v350, 64
  %v353 = vpop.permute.xlu0 %352
  %v355 = vmul.f32 %v337, %v353
  %v356 = vpack.c.bf16 %v355, %v355
  %358 = vrot.lane.b32.xlu0 %v356, 32
  %v359 = vpop.permute.xlu0 %358
  %v361 = vsel %vm145, %v359, 0
  %363 = vmatprep.subr.bf16.mxu0 0
  %364 = vmatpush1.bf16.msra.mxu0 0
  %365 = vmatprep.subr.bf16.mxu0 0
  %366 = vmatpush1.bf16.msra.mxu0 0
  %367 = vmatprep.subr.bf16.mxu0 0
  %368 = vmatpush1.bf16.msra.mxu0 0
  %369 = vmatprep.subr.bf16.mxu0 0
  %370 = vmatpush1.bf16.msra.mxu0 0
  %371 = vmatprep.subr.bf16.mxu0 0
  %372 = vmatpush1.bf16.msra.mxu0 0
  %373 = vmatprep.subr.bf16.mxu0 0
  %374 = vmatpush1.bf16.msra.mxu0 0
  %375 = vmatprep.subr.bf16.mxu0 0
  %376 = vmatpush1.bf16.msra.mxu0 %v25
  %377 = vmatprep.subr.bf16.mxu0 0
  %378 = vmatpush1.bf16.msra.mxu0 %v24
  %379 = vmatprep.subr.bf16.mxu0 0
  %380 = vmatpush2.bf16.msra.mxu0 0
  %381 = vmatprep.subr.bf16.mxu0 0
  %382 = vmatpush2.bf16.msra.mxu0 0
  %383 = vmatprep.subr.bf16.mxu0 0
  %384 = vmatpush2.bf16.msra.mxu0 0
  %385 = vmatprep.subr.bf16.mxu0 0
  %386 = vmatpush2.bf16.msra.mxu0 0
  %387 = vmatprep.subr.bf16.mxu0 0
  %388 = vmatpush2.bf16.msra.mxu0 0
  %389 = vmatprep.subr.bf16.mxu0 0
  %390 = vmatpush2.bf16.msra.mxu0 0
  %391 = vmatprep.subr.bf16.mxu0 0
  %392 = vmatpush2.bf16.msra.mxu0 0
  %393 = vmatprep.subr.bf16.mxu0 0
  %394 = vmatpush2.bf16.msra.mxu0 0
  %395 = vmatprep.mubr.bf16.mxu0 0
  %396 = vmatmul.mubr.bf16.gmra.mxu0 %v361
  %v397 = vpop.f32.mrf.mxu0
  %v398 = vadd.f32 0.0, %v397
  %v399 = vpop.f32.mrf.mxu0
  %v400 = vpop.f32.mrf.mxu0
  %v401 = vpop.f32.mrf.mxu0
  %402 = vdwg.mxu0
  %v403 = vadd.f32 %v111, %v398
  %v404 = vmul.f32 %v403, 0.5
  %v405 = vtanh.pop %v404
  %v406 = vmul.f32 %v405, 0.5
  %v407 = vadd.f32 %v406, 0.5
  %v408 = vtanh.pop %v403
  %v409 = vmul.f32 %v407, %v349
  %411 = vrot.lane.b32.xlu0 %v408, 64
  %v412 = vpop.permute.xlu0 %411
  %v414 = vmul.f32 %v407, %v412
  %416 = vrot.lane.b32.xlu0 %v414, 32
  %v417 = vpop.permute.xlu0 %416
  %v419 = vadd.f32 %v409, %v417
  %v420 = vtanh.pop %v419
  %422 = vrot.lane.b32.xlu0 %v420, 64
  %v423 = vpop.permute.xlu0 %422
  %v425 = vmul.f32 %v407, %v423
  %v426 = vpack.c.bf16 %v425, %v425
  %428 = vrot.lane.b32.xlu0 %v426, 32
  %v429 = vpop.permute.xlu0 %428
  %v431 = vsel %vm145, %v429, 0
  %433 = vmatprep.subr.bf16.mxu0 0
  %434 = vmatpush1.bf16.msra.mxu0 0
  %435 = vmatprep.subr.bf16.mxu0 0
  %436 = vmatpush1.bf16.msra.mxu0 0
  %437 = vmatprep.subr.bf16.mxu0 0
  %438 = vmatpush1.bf16.msra.mxu0 0
  %439 = vmatprep.subr.bf16.mxu0 0
  %440 = vmatpush1.bf16.msra.mxu0 0
  %441 = vmatprep.subr.bf16.mxu0 0
  %442 = vmatpush1.bf16.msra.mxu0 0
  %443 = vmatprep.subr.bf16.mxu0 0
  %444 = vmatpush1.bf16.msra.mxu0 0
  %445 = vmatprep.subr.bf16.mxu0 0
  %446 = vmatpush1.bf16.msra.mxu0 %v25
  %447 = vmatprep.subr.bf16.mxu0 0
  %448 = vmatpush1.bf16.msra.mxu0 %v24
  %449 = vmatprep.subr.bf16.mxu0 0
  %450 = vmatpush2.bf16.msra.mxu0 0
  %451 = vmatprep.subr.bf16.mxu0 0
  %452 = vmatpush2.bf16.msra.mxu0 0
  %453 = vmatprep.subr.bf16.mxu0 0
  %454 = vmatpush2.bf16.msra.mxu0 0
  %455 = vmatprep.subr.bf16.mxu0 0
  %456 = vmatpush2.bf16.msra.mxu0 0
  %457 = vmatprep.subr.bf16.mxu0 0
  %458 = vmatpush2.bf16.msra.mxu0 0
  %459 = vmatprep.subr.bf16.mxu0 0
  %460 = vmatpush2.bf16.msra.mxu0 0
  %461 = vmatprep.subr.bf16.mxu0 0
  %462 = vmatpush2.bf16.msra.mxu0 0
  %463 = vmatprep.subr.bf16.mxu0 0
  %464 = vmatpush2.bf16.msra.mxu0 0
  %465 = vmatprep.mubr.bf16.mxu0 0
  %466 = vmatmul.mubr.bf16.gmra.mxu0 %v431
  %v467 = vpop.f32.mrf.mxu0
  %v468 = vadd.f32 0.0, %v467
  %v469 = vpop.f32.mrf.mxu0
  %v470 = vpop.f32.mrf.mxu0
  %v471 = vpop.f32.mrf.mxu0
  %472 = vdwg.mxu0
  %v473 = vadd.f32 %v114, %v468
  %v474 = vmul.f32 %v473, 0.5
  %v475 = vtanh.pop %v474
  %v476 = vmul.f32 %v475, 0.5
  %v477 = vadd.f32 %v476, 0.5
  %v478 = vtanh.pop %v473
  %v479 = vmul.f32 %v477, %v419
  %481 = vrot.lane.b32.xlu0 %v478, 64
  %v482 = vpop.permute.xlu0 %481
  %v484 = vmul.f32 %v477, %v482
  %486 = vrot.lane.b32.xlu0 %v484, 32
  %v487 = vpop.permute.xlu0 %486
  %v489 = vadd.f32 %v479, %v487
  %v490 = vtanh.pop %v489
  %492 = vrot.lane.b32.xlu0 %v490, 64
  %v493 = vpop.permute.xlu0 %492
  %v495 = vmul.f32 %v477, %v493
  %v496 = vpack.c.bf16 %v495, %v495
  %498 = vrot.lane.b32.xlu0 %v496, 32
  %v499 = vpop.permute.xlu0 %498
  %v501 = vsel %vm145, %v499, 0
  %503 = vmatprep.subr.bf16.mxu0 0
  %504 = vmatpush1.bf16.msra.mxu0 0
  %505 = vmatprep.subr.bf16.mxu0 0
  %506 = vmatpush1.bf16.msra.mxu0 0
  %507 = vmatprep.subr.bf16.mxu0 0
  %508 = vmatpush1.bf16.msra.mxu0 0
  %509 = vmatprep.subr.bf16.mxu0 0
  %510 = vmatpush1.bf16.msra.mxu0 0
  %511 = vmatprep.subr.bf16.mxu0 0
  %512 = vmatpush1.bf16.msra.mxu0 0
  %513 = vmatprep.subr.bf16.mxu0 0
  %514 = vmatpush1.bf16.msra.mxu0 0
  %515 = vmatprep.subr.bf16.mxu0 0
  %516 = vmatpush1.bf16.msra.mxu0 %v25
  %517 = vmatprep.subr.bf16.mxu0 0
  %518 = vmatpush1.bf16.msra.mxu0 %v24
  %519 = vmatprep.subr.bf16.mxu0 0
  %520 = vmatpush2.bf16.msra.mxu0 0
  %521 = vmatprep.subr.bf16.mxu0 0
  %522 = vmatpush2.bf16.msra.mxu0 0
  %523 = vmatprep.subr.bf16.mxu0 0
  %524 = vmatpush2.bf16.msra.mxu0 0
  %525 = vmatprep.subr.bf16.mxu0 0
  %526 = vmatpush2.bf16.msra.mxu0 0
  %527 = vmatprep.subr.bf16.mxu0 0
  %528 = vmatpush2.bf16.msra.mxu0 0
  %529 = vmatprep.subr.bf16.mxu0 0
  %530 = vmatpush2.bf16.msra.mxu0 0
  %531 = vmatprep.subr.bf16.mxu0 0
  %532 = vmatpush2.bf16.msra.mxu0 0
  %533 = vmatprep.subr.bf16.mxu0 0
  %534 = vmatpush2.bf16.msra.mxu0 0
  %535 = vmatprep.mubr.bf16.mxu0 0
  %536 = vmatmul.mubr.bf16.gmra.mxu0 %v501
  %v537 = vpop.f32.mrf.mxu0
  %v538 = vadd.f32 0.0, %v537
  %v539 = vpop.f32.mrf.mxu0
  %v540 = vpop.f32.mrf.mxu0
  %v541 = vpop.f32.mrf.mxu0
  %542 = vdwg.mxu0
  %v543 = vadd.f32 %v119, %v538
  %v544 = vmul.f32 %v543, 0.5
  %v545 = vtanh.pop %v544
  %v546 = vmul.f32 %v545, 0.5
  %v547 = vadd.f32 %v546, 0.5
  %v548 = vtanh.pop %v543
  %v549 = vmul.f32 %v547, %v489
  %551 = vrot.lane.b32.xlu0 %v548, 64
  %v552 = vpop.permute.xlu0 %551
  %v554 = vmul.f32 %v547, %v552
  %556 = vrot.lane.b32.xlu0 %v554, 32
  %v557 = vpop.permute.xlu0 %556
  %v559 = vadd.f32 %v549, %v557
  %v560 = vtanh.pop %v559
  %562 = vrot.lane.b32.xlu0 %v560, 64
  %v563 = vpop.permute.xlu0 %562
  %v565 = vmul.f32 %v547, %v563
  %v566 = vpack.c.bf16 %v565, %v565
  %568 = vrot.lane.b32.xlu0 %v566, 32
  %v569 = vpop.permute.xlu0 %568
  %v571 = vsel %vm145, %v569, 0
  %573 = vmatprep.subr.bf16.mxu0 0
  %574 = vmatpush1.bf16.msra.mxu0 0
  %575 = vmatprep.subr.bf16.mxu0 0
  %576 = vmatpush1.bf16.msra.mxu0 0
  %577 = vmatprep.subr.bf16.mxu0 0
  %578 = vmatpush1.bf16.msra.mxu0 0
  %579 = vmatprep.subr.bf16.mxu0 0
  %580 = vmatpush1.bf16.msra.mxu0 0
  %581 = vmatprep.subr.bf16.mxu0 0
  %582 = vmatpush1.bf16.msra.mxu0 0
  %583 = vmatprep.subr.bf16.mxu0 0
  %584 = vmatpush1.bf16.msra.mxu0 0
  %585 = vmatprep.subr.bf16.mxu0 0
  %586 = vmatpush1.bf16.msra.mxu0 %v25
  %587 = vmatprep.subr.bf16.mxu0 0
  %588 = vmatpush1.bf16.msra.mxu0 %v24
  %589 = vmatprep.subr.bf16.mxu0 0
  %590 = vmatpush2.bf16.msra.mxu0 0
  %591 = vmatprep.subr.bf16.mxu0 0
  %592 = vmatpush2.bf16.msra.mxu0 0
  %593 = vmatprep.subr.bf16.mxu0 0
  %594 = vmatpush2.bf16.msra.mxu0 0
  %595 = vmatprep.subr.bf16.mxu0 0
  %596 = vmatpush2.bf16.msra.mxu0 0
  %597 = vmatprep.subr.bf16.mxu0 0
  %598 = vmatpush2.bf16.msra.mxu0 0
  %599 = vmatprep.subr.bf16.mxu0 0
  %600 = vmatpush2.bf16.msra.mxu0 0
  %601 = vmatprep.subr.bf16.mxu0 0
  %602 = vmatpush2.bf16.msra.mxu0 0
  %603 = vmatprep.subr.bf16.mxu0 0
  %604 = vmatpush2.bf16.msra.mxu0 0
  %605 = vmatprep.mubr.bf16.mxu0 0
  %606 = vmatmul.mubr.bf16.gmra.mxu0 %v571
  %v607 = vpop.f32.mrf.mxu0
  %v608 = vadd.f32 0.0, %v607
  %v609 = vpop.f32.mrf.mxu0
  %v610 = vpop.f32.mrf.mxu0
  %v611 = vpop.f32.mrf.mxu0
  %612 = vdwg.mxu0
  %v613 = vadd.f32 %v122, %v608
  %v614 = vmul.f32 %v613, 0.5
  %v615 = vtanh.pop %v614
  %v616 = vmul.f32 %v615, 0.5
  %v617 = vadd.f32 %v616, 0.5
  %v618 = vtanh.pop %v613
  %v619 = vmul.f32 %v617, %v559
  %621 = vrot.lane.b32.xlu0 %v618, 64
  %v622 = vpop.permute.xlu0 %621
  %v624 = vmul.f32 %v617, %v622
  %626 = vrot.lane.b32.xlu0 %v624, 32
  %v627 = vpop.permute.xlu0 %626
  %v629 = vadd.f32 %v619, %v627
  %v630 = vtanh.pop %v629
  %632 = vrot.lane.b32.xlu0 %v630, 64
  %v633 = vpop.permute.xlu0 %632
  %v635 = vmul.f32 %v617, %v633
  %v636 = vld [vmem:[%s1 + $0x50] sm:$0xff]
  %v637 = vld [vmem:[%s1 + $0x58] sm:$0xff]
  %v638 = vld [vmem:[%s1 + $0x60] sm:$0xff]
  %v639 = vld [vmem:[%s1 + $0x68] sm:$0xff]
  %v640 = vld [vmem:[%s1 + $0x70] sm:$0x1]
  %v641 = vld [vmem:[%s1 + $0x78] sm:$0xff]
  %v642 = vld [vmem:[%s1 + $0x80] sm:$0xff]
  %v643 = vld [vmem:[%s1 + $0x88] sm:$0xff]
  %v644 = vld [vmem:[%s1 + $0x90] sm:$0xff]
  %v645 = vld [vmem:[%s1 + $0x98] sm:$0xff]
  %v646 = vld [vmem:[%s1 + $0xa0] sm:$0xff]
  %v647 = vld [vmem:[%s1 + $0xa8] sm:$0xff]
  %v648 = vld [vmem:[%s1 + $0xb0] sm:$0xff]
  %v649 = vld [vmem:[%s1 + $0xb8] sm:$0xff]
  %v650 = vld [vmem:[%s1 + $0xc0] sm:$0xff]
  %v651 = vld [vmem:[%s1 + $0xc8] sm:$0xff]
  %v652 = vld [vmem:[%s1 + $0xd0] sm:$0xff]
  %v653 = vld [vmem:[%s1 + $0xd8] sm:$0xff]
  %v654 = vld [vmem:[%s1 + $0xe0] sm:$0xff]
  %v655 = vld [vmem:[%s1 + $0xe8] sm:$0xff]
  %v656 = vld [vmem:[%s1 + $0xf0] sm:$0xff]
  %v657 = vld [vmem:[%s1 + $0xf8] sm:$0x1]
  %v658 = vlaneseq
  %v659 = vshrl.u32 %v658, 7
  %v660 = vsub.s32 0, %v659
  %v661 = vrot.slane %v640, %v660
  %663 = vrot.lane.b32.xlu0 %v635, 32
  %v664 = vpop.permute.xlu0 %663
  %v665 = vsel %vm145, %v664, 0
  %667 = vmatprep.subr.mxu0 0.0
  %668 = vmatpush1.msra.mxu0 0.0
  %669 = vmatprep.subr.mxu0 0.0
  %670 = vmatpush1.msra.mxu0 0.0
  %671 = vmatprep.subr.mxu0 0.0
  %672 = vmatpush1.msra.mxu0 0.0
  %673 = vmatprep.subr.mxu0 0.0
  %674 = vmatpush1.msra.mxu0 0.0
  %675 = vmatprep.subr.mxu0 0.0
  %676 = vmatpush1.msra.mxu0 0.0
  %677 = vmatprep.subr.mxu0 0.0
  %678 = vmatpush1.msra.mxu0 0.0
  %679 = vmatprep.subr.mxu0 0.0
  %680 = vmatpush1.msra.mxu0 0.0
  %681 = vmatprep.subr.mxu0 0.0
  %682 = vmatpush1.msra.mxu0 0.0
  %683 = vmatprep.subr.mxu0 0.0
  %684 = vmatpush1.msra.mxu0 0.0
  %685 = vmatprep.subr.mxu0 0.0
  %686 = vmatpush1.msra.mxu0 0.0
  %687 = vmatprep.subr.mxu0 0.0
  %688 = vmatpush1.msra.mxu0 0.0
  %689 = vmatprep.subr.mxu0 0.0
  %690 = vmatpush1.msra.mxu0 0.0
  %691 = vmatprep.subr.mxu0 0.0
  %692 = vmatpush1.msra.mxu0 %v639
  %693 = vmatprep.subr.mxu0 0.0
  %694 = vmatpush1.msra.mxu0 %v638
  %695 = vmatprep.subr.mxu0 0.0
  %696 = vmatpush1.msra.mxu0 %v637
  %697 = vmatprep.subr.mxu0 0.0
  %698 = vmatpush1.msra.mxu0 %v636
  %699 = vmatprep.subr.mxu0 0.0
  %700 = vmatpush2.msra.mxu0 0.0
  %701 = vmatprep.subr.mxu0 0.0
  %702 = vmatpush2.msra.mxu0 0.0
  %703 = vmatprep.subr.mxu0 0.0
  %704 = vmatpush2.msra.mxu0 0.0
  %705 = vmatprep.subr.mxu0 0.0
  %706 = vmatpush2.msra.mxu0 0.0
  %707 = vmatprep.subr.mxu0 0.0
  %708 = vmatpush2.msra.mxu0 0.0
  %709 = vmatprep.subr.mxu0 0.0
  %710 = vmatpush2.msra.mxu0 0.0
  %711 = vmatprep.subr.mxu0 0.0
  %712 = vmatpush2.msra.mxu0 0.0
  %713 = vmatprep.subr.mxu0 0.0
  %714 = vmatpush2.msra.mxu0 0.0
  %715 = vmatprep.subr.mxu0 0.0
  %716 = vmatpush2.msra.mxu0 0.0
  %717 = vmatprep.subr.mxu0 0.0
  %718 = vmatpush2.msra.mxu0 0.0
  %719 = vmatprep.subr.mxu0 0.0
  %720 = vmatpush2.msra.mxu0 0.0
  %721 = vmatprep.subr.mxu0 0.0
  %722 = vmatpush2.msra.mxu0 0.0
  %723 = vmatprep.subr.mxu0 0.0
  %724 = vmatpush2.msra.mxu0 0.0
  %725 = vmatprep.subr.mxu0 0.0
  %726 = vmatpush2.msra.mxu0 0.0
  %727 = vmatprep.subr.mxu0 0.0
  %728 = vmatpush2.msra.mxu0 0.0
  %729 = vmatprep.subr.mxu0 0.0
  %730 = vmatpush2.msra.mxu0 0.0
  %731 = vmatprep.mubr.f32.mxu0 0.0
  %732 = vmatmul.mubr.f32.gmra.mxu0 %v665
  %v733 = vpop.f32.mrf.mxu0
  %v734 = vadd.f32 %v661, %v733
  %v735 = vpop.f32.mrf.mxu0
  %736 = vdwg.mxu0
  %v737 = vmax.f32 %v734, 0.0
  %v738 = vlaneseq
  %v739 = vshrl.u32 %v738, 7
  %v740 = vsub.s32 0, %v739
  %v741 = vrot.slane %v657, %v740
  %742 = vmatprep.subr.mxu0 0.0
  %743 = vmatpush1.msra.mxu0 %v656
  %744 = vmatprep.subr.mxu0 0.0
  %745 = vmatpush1.msra.mxu0 %v655
  %746 = vmatprep.subr.mxu0 0.0
  %747 = vmatpush1.msra.mxu0 %v654
  %748 = vmatprep.subr.mxu0 0.0
  %749 = vmatpush1.msra.mxu0 %v653
  %750 = vmatprep.subr.mxu0 0.0
  %751 = vmatpush1.msra.mxu0 %v652
  %752 = vmatprep.subr.mxu0 0.0
  %753 = vmatpush1.msra.mxu0 %v651
  %754 = vmatprep.subr.mxu0 0.0
  %755 = vmatpush1.msra.mxu0 %v650
  %756 = vmatprep.subr.mxu0 0.0
  %757 = vmatpush1.msra.mxu0 %v649
  %758 = vmatprep.subr.mxu0 0.0
  %759 = vmatpush1.msra.mxu0 %v648
  %760 = vmatprep.subr.mxu0 0.0
  %761 = vmatpush1.msra.mxu0 %v647
  %762 = vmatprep.subr.mxu0 0.0
  %763 = vmatpush1.msra.mxu0 %v646
  %764 = vmatprep.subr.mxu0 0.0
  %765 = vmatpush1.msra.mxu0 %v645
  %766 = vmatprep.subr.mxu0 0.0
  %767 = vmatpush1.msra.mxu0 %v644
  %768 = vmatprep.subr.mxu0 0.0
  %769 = vmatpush1.msra.mxu0 %v643
  %770 = vmatprep.subr.mxu0 0.0
  %771 = vmatpush1.msra.mxu0 %v642
  %772 = vmatprep.subr.mxu0 0.0
  %773 = vmatpush1.msra.mxu0 %v641
  %774 = vmatprep.subr.mxu0 0.0
  %775 = vmatpush2.msra.mxu0 0.0
  %776 = vmatprep.subr.mxu0 0.0
  %777 = vmatpush2.msra.mxu0 0.0
  %778 = vmatprep.subr.mxu0 0.0
  %779 = vmatpush2.msra.mxu0 0.0
  %780 = vmatprep.subr.mxu0 0.0
  %781 = vmatpush2.msra.mxu0 0.0
  %782 = vmatprep.subr.mxu0 0.0
  %783 = vmatpush2.msra.mxu0 0.0
  %784 = vmatprep.subr.mxu0 0.0
  %785 = vmatpush2.msra.mxu0 0.0
  %786 = vmatprep.subr.mxu0 0.0
  %787 = vmatpush2.msra.mxu0 0.0
  %788 = vmatprep.subr.mxu0 0.0
  %789 = vmatpush2.msra.mxu0 0.0
  %790 = vmatprep.subr.mxu0 0.0
  %791 = vmatpush2.msra.mxu0 0.0
  %792 = vmatprep.subr.mxu0 0.0
  %793 = vmatpush2.msra.mxu0 0.0
  %794 = vmatprep.subr.mxu0 0.0
  %795 = vmatpush2.msra.mxu0 0.0
  %796 = vmatprep.subr.mxu0 0.0
  %797 = vmatpush2.msra.mxu0 0.0
  %798 = vmatprep.subr.mxu0 0.0
  %799 = vmatpush2.msra.mxu0 0.0
  %800 = vmatprep.subr.mxu0 0.0
  %801 = vmatpush2.msra.mxu0 0.0
  %802 = vmatprep.subr.mxu0 0.0
  %803 = vmatpush2.msra.mxu0 0.0
  %804 = vmatprep.subr.mxu0 0.0
  %805 = vmatpush2.msra.mxu0 0.0
  %806 = vmatprep.mubr.f32.mxu0 0.0
  %807 = vmatmul.mubr.f32.gmra.mxu0 %v737
  %v808 = vpop.f32.mrf.mxu0
  %v809 = vadd.f32 %v741, %v808
  %v810 = vpop.f32.mrf.mxu0
  %811 = vdwg.mxu0
  %812 = vst [vmem:[%s2] sm:$0xff] %v809
  // Predicated region
  $region10: #{lstm_model_forward.1} parent=0 // pred_check
    _
  $region11: #{lstm_model_forward.1} parent=0 // pred_check_branch
    %814 = sbr.rel (0) target = $region13
  $region12: #{lstm_model_forward.1} parent=0 // pred_region
    _
  $region13: #{lstm_model_forward.1} parent=0 // pred_fallthru
    _
  // Predicated region
  $region14: #{lstm_model_forward.1} parent=0 // pred_check
    _
  $region15: #{lstm_model_forward.1} parent=0 // pred_check_branch
    %816 = sbr.rel (0) target = $region17
  $region16: #{lstm_model_forward.1} parent=0 // pred_region
    _
  $region17: #{lstm_model_forward.1} parent=0 // pred_fallthru
    _

</llo_original>
